<compile_context>
chip_gen: v6e
topology: v6e:2x2x1
jax: 0.10.0
libtpu: 0.0.40
codegen_flags: <defaults>
</compile_context>

<pallas_src>
import jax
import jax.numpy as jnp
from jax.experimental import pallas as pl
from jax.experimental.pallas import tpu as pltpu


def _identity_copy_kernel(x_ref, o_ref):
    # Pass-through: copy the current VMEM tile to the output tile.
    o_ref[...] = x_ref[...]


# Per-tile byte budget (per buffer).  With double buffering on input + output
# this keeps total VMEM use well under the scoped limits of every generation
# (16 MiB v5e, 32 MiB v6e/v7x scoped; 64 MiB physical VMEM on v7x).
_MAX_TILE_BYTES = 2 * 1024 * 1024


def _lane_dense_width(n: int):
    """Widest power-of-two multiple of 128 (up to 1024) that divides n."""
    for w in (1024, 512, 256, 128):
        if n % w == 0:
            return w
    return None


def identity(x: jax.Array) -> jax.Array:
    """Pallas identity: returns a tensor equal to x (same shape/dtype)."""
    if x.size == 0:
        return x  # nothing to copy

    orig_shape = x.shape
    n = x.size

    # --- Lane-dense 2-D flatten -------------------------------------------
    w = _lane_dense_width(n)
    if w is None:
        # Fallback for sizes not divisible by 128: single whole-array block
        # (full-extent blocks are always layout-legal).
        w = orig_shape[-1] if x.ndim >= 1 else n
        if w <= 0 or n % w != 0:
            w = n
    rows = n // w
    flat = x.reshape(rows, w)

    # --- Row-tile size -----------------------------------------------------
    bytes_per_row = w * flat.dtype.itemsize
    tr = max(1, min(rows, _MAX_TILE_BYTES // max(1, bytes_per_row)))
    if tr < rows:
        # Tiled path: keep sublane (8) alignment so blocks stay layout-legal.
        tr = max(8, (tr // 8) * 8)
    if w % 128 != 0:
        # Non-lane-dense fallback must use a single full-extent block.
        tr = rows
    grid = (pl.cdiv(rows, tr),)

    out = pl.pallas_call(
        _identity_copy_kernel,
        out_shape=jax.ShapeDtypeStruct(flat.shape, flat.dtype),
        grid=grid,
        in_specs=[pl.BlockSpec((tr, w), lambda i: (i, 0))],
        out_specs=pl.BlockSpec((tr, w), lambda i: (i, 0)),
        # Output aliases the input buffer (no extra HBM write when donated).
        input_output_aliases={0: 0},
        compiler_params=pltpu.CompilerParams(
            dimension_semantics=("parallel",),
        ),
    )(flat)
    return out.reshape(orig_shape)


if __name__ == "__main__":
    key = jax.random.PRNGKey(0)
    x = jax.random.normal(key, (2, 4, 16, 16), dtype=jnp.float32)  # NCHW
    y = identity(x)
    jax.block_until_ready(y)
    assert y.shape == x.shape and y.dtype == x.dtype
    assert bool(jnp.all(y == x))
    print("KERNEL_OK")
</pallas_src>

<mosaic_0001>
module attributes {stable_mosaic.version = 11 : i64} {
  func.func @_identity_copy_kernel(%arg0: i32, %arg1: memref<2x1024xf32, #tpu.memory_space<vmem>>, %arg2: memref<2x1024xf32, #tpu.memory_space<vmem>>) attributes {dimension_semantics = [#tpu.dimension_semantics<parallel>], iteration_bounds = array<i64: 1>, scalar_prefetch = 0 : i64, scratch_operands = 0 : i64, tpu.core_type = #tpu.core_type<tc>, window_params = [{transform_indices = @transform_0, window_bounds = array<i64: 2, 1024>}, {transform_indices = @transform_1, window_bounds = array<i64: 2, 1024>}]} {
    %c0 = arith.constant 0 : index
    %c0_0 = arith.constant 0 : index
    %0 = vector.load %arg1[%c0, %c0_0] : memref<2x1024xf32, #tpu.memory_space<vmem>>, vector<2x1024xf32>
    %c0_1 = arith.constant 0 : index
    %c0_2 = arith.constant 0 : index
    %1 = vector.load %arg2[%c0_1, %c0_2] : memref<2x1024xf32, #tpu.memory_space<vmem>>, vector<2x1024xf32>
    tpu.vector_store %arg2[%c0_1, %c0_2], %0 {strides = array<i32>} : memref<2x1024xf32, #tpu.memory_space<vmem>>, vector<2x1024xf32>,
    return
  }
  func.func @transform_0(%arg0: i32) -> (i32, i32) {
    %c0_i32 = arith.constant 0 : i32
    %c0_i32_0 = arith.constant 0 : i32
    return %arg0, %c0_i32 : i32, i32
  }
  func.func @transform_1(%arg0: i32) -> (i32, i32) {
    %c0_i32 = arith.constant 0 : i32
    %c0_i32_0 = arith.constant 0 : i32
    return %arg0, %c0_i32 : i32, i32
  }
}

</mosaic_0001>

<llo_original>
// kernel: tpu_custom_call.1
$region0: #{tpu_custom_call.1}
  #allocation0 [shape = 'u32[]', space=smem, size = 0x4, offset = 0x4, fixed_abs, tag = 'smem constant byte address 0x4 - core index']
  #allocation1 [shape = 'u32[144,128]{1,0:T(1,128)}', space=vmem, size = 0x12000, scoped, tag = 'internal scratch']
  %s0 = inlined_call_operand.hbm [shape: f32[2,1024], index: 0, kind: input, shape index: {}, may-alias: {0,1}]
  %s1 = inlined_call_operand.hbm [shape: f32[2,1024], index: 1, kind: output, shape index: {}, may-alias: {0,1}]
  %s2 = sld [smem:[#allocation0]]
  $region18: #{tpu_custom_call.1} parent=0
    _
  %s4 = ssub.s32 1, %s2
  %s5 = scalar_select 0, %s4, %s2
  $region1: #{tpu_custom_call.1} parent=0
    #allocation2 [shape = 'u8[8192]{0}', space=vmem, size = 0x2000, scoped, tag = 'input window, operand 0, single buffered']
    #allocation3 [shape = 's32[1]{0}', space=sflag, size = 0x4, scoped, tag = 'scoped memory for tpu_custom_call.1']
    #allocation4 [shape = 's32[1]{0}', space=sflag, size = 0x4, scoped, tag = 'scoped memory for tpu_custom_call.1']
    #allocation5 [shape = 'u8[8192]{0}', space=vmem, size = 0x2000, scoped, tag = 'output window, operand 0, single buffered']
    %6 = vsyncpa [#allocation3], 0
    %7 = vsyncpa [#allocation4], 0
    // Predicated region
    $region2: #{tpu_custom_call.1} parent=1 // pred_check
      _
    $region3: #{tpu_custom_call.1} parent=1 // pred_check_branch
      %9 = sbr.rel (0) target = $region5
    $region4: #{tpu_custom_call.1} parent=1 // pred_region
      %s11 = ssub.s32 256, 256
      %12 = vsyncadd [#allocation3], %s11
      %s14 = sshll.u32 [#allocation2], 4
      %s15 = int_to_ptr.vmem [resolvable:$true] %s14
      %17 = dma.hbm_to_vmem [thread:$0]  %s0, 256, %s15, [#allocation3]
    $region5: #{tpu_custom_call.1} parent=1 // pred_fallthru
      _
    // Predicated region
    $region6: #{tpu_custom_call.1} parent=1 // pred_check
      _
    $region7: #{tpu_custom_call.1} parent=1 // pred_check_branch
      %19 = sbr.rel (0) target = $region9
    $region8: #{tpu_custom_call.1} parent=1 // pred_region
      %20 = dma.done [#allocation3], 256
    $region9: #{tpu_custom_call.1} parent=1 // pred_fallthru
      _
    %v21 = vld [vmem:[#allocation2] sm:$0xff]
    %v22 = vld [vmem:[#allocation2 + $0x8] sm:$0xff]
    %23 = vst [vmem:[#allocation5] sm:$0xff] %v21
    %24 = vst [vmem:[#allocation5 + $0x8] sm:$0xff] %v22
    // Predicated region
    $region10: #{tpu_custom_call.1} parent=1 // pred_check
      _
    $region11: #{tpu_custom_call.1} parent=1 // pred_check_branch
      %26 = sbr.rel (0) target = $region13
    $region12: #{tpu_custom_call.1} parent=1 // pred_region
      %s28 = ssub.s32 256, 256
      %29 = vsyncadd [#allocation4], %s28
      %s31 = sshll.u32 [#allocation5], 4
      %s32 = int_to_ptr.vmem [resolvable:$true] %s31
      %34 = dma.vmem_to_hbm [thread:$0]  %s32, 256, %s1, [#allocation4]
    $region13: #{tpu_custom_call.1} parent=1 // pred_fallthru
      _
    // Predicated region
    $region14: #{tpu_custom_call.1} parent=1 // pred_check
      _
    $region15: #{tpu_custom_call.1} parent=1 // pred_check_branch
      %36 = sbr.rel (0) target = $region17
    $region16: #{tpu_custom_call.1} parent=1 // pred_region
      %37 = dma.done [#allocation4], 256
    $region17: #{tpu_custom_call.1} parent=1 // pred_fallthru
      _
    %38 = vsyncpa [#allocation3], 1
    %39 = vsyncpa [#allocation4], 1

</llo_original>
